<compile_context>
chip_gen: v5e
topology: v5e:2x2
jax: 0.10.0
libtpu: 0.0.40
codegen_flags: <defaults>
</compile_context>

<pallas_src>
import jax
import jax.numpy as jnp
from jax.experimental import pallas as pl
from jax.experimental.pallas import tpu as pltpu

# ---------------- model hyper-params (mirrors SPICE.__init__ defaults) ----------------
D            = 3          # spatial dimension
SPATIAL_SIZE = 16.0
NUM_FILTERS  = 16
SIGMA_DIM    = 1
SEED_DIM     = 1
SKIP_CLASSES = (2, 3, 4)
COORD_CONV   = True
BN_EPS       = 1e-5
F_IN         = D + 1               # coordConv: D normalized coords + 1 raw feature
IN_PAD       = 8                   # feature rows padded to one sublane group
OUT_E        = D + SIGMA_DIM       # embedding-head output width (4)
OUT_DIM      = OUT_E + SEED_DIM    # total useful output rows (5)
OUT_PAD      = 8                   # output rows padded to one sublane group
HID          = 2 * NUM_FILTERS     # fused backbone width (32)

# Streaming / tiling knobs (perf review).
IO_DTYPE     = jnp.bfloat16        # halves HBM traffic; compute stays f32 in-kernel
MAX_TILE_N   = 16384               # points per grid step (lane-dense, mult. of 128)
MIN_N_PAD    = 1024                # smallest padding bucket


# ------------------------------- Pallas kernel ----------------------------------------
def spice_kernel(x_ref, wbb_ref, whd_ref, bhd_ref, mt_ref, ss_ref, out_ref):
    # x: (IN_PAD, T); rows 0..D-1 = normalized coords, row D = raw feature, rest 0.
    x = x_ref[...].astype(jnp.float32)

    # Fused backbone for both branches (rows 0:16 -> embedding, 16:32 -> seediness).
    h = jnp.maximum(
        jnp.dot(wbb_ref[...], x, preferred_element_type=jnp.float32), 0.0)      # (HID, T)

    # BN-folded, block-diagonal heads (single matmul) + folded bias.
    y = jnp.dot(whd_ref[...], h, preferred_element_type=jnp.float32) + bhd_ref[...]  # (OUT_PAD, T)

    # One exp per element drives both activations (single EUP slot):
    #   sigmoid(y) = 1/(1 + e^-y),  tanh(y) = (1 - e^-2y)/(1 + e^-2y).
    yc = jnp.clip(y, -30.0, 30.0)                    # keeps u*u finite in f32
    u = jnp.exp(-yc)
    sig = pl.reciprocal(1.0 + u, approx=True)
    u2 = u * u
    th = (1.0 - u2) * pl.reciprocal(1.0 + u2, approx=True)

    # Row select via constant (OUT_PAD, 1) columns broadcast along lanes
    # (mask_tanh = [1,1,1,0,...], scale_sig = [0,0,0,2,1,0,0,0]); no iota/where temps.
    out = mt_ref[...] * (th + x) + ss_ref[...] * sig
    out_ref[...] = out.astype(out_ref.dtype)


def spice_heads_pallas(x_cm, fparams, tile_n):
    """x_cm: (IN_PAD, n_pad) channel-major input (IO_DTYPE); n_pad % tile_n == 0."""
    _, n_pad = x_cm.shape
    assert n_pad % tile_n == 0
    grid = (n_pad // tile_n,)

    return pl.pallas_call(
        spice_kernel,
        grid=grid,
        in_specs=[
            pl.BlockSpec((IN_PAD, tile_n), lambda i: (0, i)),      # points (lane-dense)
            pl.BlockSpec((HID, IN_PAD),    lambda i: (0, 0)),      # fused backbone weight
            pl.BlockSpec((OUT_PAD, HID),   lambda i: (0, 0)),      # folded head weight
            pl.BlockSpec((OUT_PAD, 1),     lambda i: (0, 0)),      # folded head bias
            pl.BlockSpec((OUT_PAD, 1),     lambda i: (0, 0)),      # tanh-row mask
            pl.BlockSpec((OUT_PAD, 1),     lambda i: (0, 0)),      # sigmoid-row scale
        ],
        out_specs=pl.BlockSpec((OUT_PAD, tile_n), lambda i: (0, i)),
        out_shape=jax.ShapeDtypeStruct((OUT_PAD, n_pad), x_cm.dtype),
        compiler_params=pltpu.CompilerParams(dimension_semantics=("parallel",)),
    )(x_cm, fparams["wbb"], fparams["whd"], fparams["bhd"],
      fparams["mask_tanh"], fparams["scale_sig"])


# --------------------------- parameter folding (wrapper-time) -------------------------
def fold_params(params):
    """Fold eval-mode MinkowskiBatchNorm into the bias-free MinkowskiLinear heads.

    The PyTorch heads are nn.Sequential(BatchNorm, Linear(bias=False)), i.e.
    y = W @ BN(h); the fold below applies the BN scale on the *input* side of W,
    matching that ordering. Both branches are concatenated into one backbone
    weight + one block-diagonal head so the kernel does exactly two matmuls."""
    def fold_head(gamma, beta, mean, var, w):
        scale = gamma * jax.lax.rsqrt(var + BN_EPS)          # (1, NF)
        w_f = scale.reshape(-1, 1) * w                       # (NF, out)
        b_f = (beta - mean * scale) @ w                      # (1, out)
        return w_f, b_f

    we, be = fold_head(params["gamma_e"], params["beta_e"],
                       params["mean_e"], params["var_e"], params["w_embed"])
    ws, bs = fold_head(params["gamma_s"], params["beta_s"],
                       params["mean_s"], params["var_s"], params["w_seed"])

    # Fused backbone weight, (HID, IN_PAD); padded input columns are zero-weighted.
    wbb = jnp.zeros((HID, IN_PAD), jnp.float32)
    wbb = wbb.at[:NUM_FILTERS, :F_IN].set(params["wc"].T)
    wbb = wbb.at[NUM_FILTERS:, :F_IN].set(params["ws"].T)

    # Block-diagonal folded head weight, (OUT_PAD, HID).
    whd = jnp.zeros((OUT_PAD, HID), jnp.float32)
    whd = whd.at[:OUT_E, :NUM_FILTERS].set(we.T)
    whd = whd.at[OUT_E:OUT_DIM, NUM_FILTERS:].set(ws.T)

    bhd = jnp.zeros((OUT_PAD, 1), jnp.float32)
    bhd = bhd.at[:OUT_E, 0].set(be.reshape(-1))
    bhd = bhd.at[OUT_E:OUT_DIM, 0].set(bs.reshape(-1))

    # Row-select constants (broadcast along lanes inside the kernel).
    mask_tanh = jnp.zeros((OUT_PAD, 1), jnp.float32).at[:D, 0].set(1.0)
    scale_sig = (jnp.zeros((OUT_PAD, 1), jnp.float32)
                 .at[D, 0].set(2.0)                              # margins  = 2*sigmoid
                 .at[OUT_E:OUT_DIM, 0].set(1.0))                 # seediness =   sigmoid

    return {"wbb": wbb, "whd": whd, "bhd": bhd,
            "mask_tanh": mask_tanh, "scale_sig": scale_sig}


# ------------------------------- SPICE forward (glue) ---------------------------------
def _bucket_pad(n):
    """Round n up to a power-of-two bucket (bounds the number of compiled variants)."""
    b = MIN_N_PAD
    while b < n:
        b *= 2
    return b


def spice_forward(point_cloud, label, params, fparams=None):
    """point_cloud: (N, D+2) f32 [batch, x, y, z, feat]; label: (N, L), class in last col."""
    if fparams is None:
        fparams = fold_params(params)

    # filter_class — data-dependent output shape, so it runs eagerly (outside jit).
    cls = label[:, -1]
    mask = jnp.ones(cls.shape[0], dtype=bool)
    for c in SKIP_CLASSES:
        mask = mask & (cls != c)
    pc = point_cloud[mask]
    n = int(pc.shape[0])

    # Build the channel-major input directly (cheap (D+2)-row transpose of the raw
    # point cloud, then row slices + pad; no zeros().at[].set scatter pass).
    half = SPATIAL_SIZE / 2.0
    pc_cm = pc.T                                                           # (D+2, n)
    ncoords_cm = (pc_cm[1:D + 1].astype(jnp.int32).astype(jnp.float32) - half) / half
    feat_cm = pc_cm[D + 1:D + 2].astype(jnp.float32)                       # (1, n)
    feats_cm = (jnp.concatenate([ncoords_cm, feat_cm], axis=0)
                if COORD_CONV else feat_cm)                                # (F_IN, n)

    n_pad = _bucket_pad(n)
    tile_n = min(n_pad, MAX_TILE_N)
    x_cm = jnp.pad(feats_cm, ((0, IN_PAD - feats_cm.shape[0]),
                              (0, n_pad - n))).astype(IO_DTYPE)            # (IN_PAD, n_pad)

    out_cm = spice_heads_pallas(x_cm, fparams, tile_n)                     # (OUT_PAD, n_pad)
    out = out_cm[:OUT_DIM, :n].astype(jnp.float32).T                       # (n, OUT_DIM)

    return {
        "embeddings": [out[:, :D]],
        "seediness":  [out[:, D + SIGMA_DIM:D + SIGMA_DIM + SEED_DIM]],
        "margins":    [out[:, D:D + SIGMA_DIM]],
    }


def init_params(key):
    ks = jax.random.split(key, 4)
    return {
        "wc":      0.1 * jax.random.normal(ks[0], (F_IN, NUM_FILTERS), jnp.float32),
        "ws":      0.1 * jax.random.normal(ks[1], (F_IN, NUM_FILTERS), jnp.float32),
        "gamma_e": jnp.ones((1, NUM_FILTERS), jnp.float32),
        "beta_e":  jnp.zeros((1, NUM_FILTERS), jnp.float32),
        "mean_e":  jnp.zeros((1, NUM_FILTERS), jnp.float32),
        "var_e":   jnp.ones((1, NUM_FILTERS), jnp.float32),
        "w_embed": 0.1 * jax.random.normal(ks[2], (NUM_FILTERS, D + SIGMA_DIM), jnp.float32),
        "gamma_s": jnp.ones((1, NUM_FILTERS), jnp.float32),
        "beta_s":  jnp.zeros((1, NUM_FILTERS), jnp.float32),
        "mean_s":  jnp.zeros((1, NUM_FILTERS), jnp.float32),
        "var_s":   jnp.ones((1, NUM_FILTERS), jnp.float32),
        "w_seed":  0.1 * jax.random.normal(ks[3], (NUM_FILTERS, SEED_DIM), jnp.float32),
    }


def _reference(features, ncoords, params):
    """Pure-JAX f32 reference of the post-backbone SPICE heads (same stand-in backbone)."""
    def bn(h, g, b, m, v):
        return g * (h - m) * jax.lax.rsqrt(v + BN_EPS) + b
    hc = jnp.maximum(features @ params["wc"], 0.0)
    hs = jnp.maximum(features @ params["ws"], 0.0)
    e = bn(hc, params["gamma_e"], params["beta_e"],
           params["mean_e"], params["var_e"]) @ params["w_embed"]
    s = bn(hs, params["gamma_s"], params["beta_s"],
           params["mean_s"], params["var_s"]) @ params["w_seed"]
    emb = jnp.tanh(e[:, :D]) + ncoords
    margins = 2.0 * jax.nn.sigmoid(e[:, D:D + SIGMA_DIM])
    seed = jax.nn.sigmoid(s)
    return emb, margins, seed


if __name__ == "__main__":
    key = jax.random.PRNGKey(0)
    k_c, k_f, k_l, k_p = jax.random.split(key, 4)

    N = 64
    batch_idx = jnp.zeros((N, 1), jnp.float32)
    spatial = jax.random.randint(k_c, (N, D), 0, int(SPATIAL_SIZE)).astype(jnp.float32)
    feat = jax.random.normal(k_f, (N, 1), jnp.float32)
    point_cloud = jnp.concatenate([batch_idx, spatial, feat], axis=1)        # (64, 5)
    classes = jax.random.randint(k_l, (N, 1), 0, 5).astype(jnp.float32)
    label = jnp.concatenate([batch_idx, classes], axis=1)                    # (64, 2)

    params = init_params(k_p)
    fparams = fold_params(params)

    res = spice_forward(point_cloud, label, params, fparams)
    emb = jax.block_until_ready(res["embeddings"][0])
    seed = jax.block_until_ready(res["seediness"][0])
    marg = jax.block_until_ready(res["margins"][0])

    # Lightweight correctness check against a pure-JAX f32 reference (tolerance covers
    # bf16 streaming I/O and approx EUP reciprocals).
    cls = label[:, -1]
    keep = jnp.ones(cls.shape[0], dtype=bool)
    for c in SKIP_CLASSES:
        keep = keep & (cls != c)
    pc = point_cloud[keep]
    half = SPATIAL_SIZE / 2.0
    ncoords = (pc[:, 1:D + 1].astype(jnp.int32).astype(jnp.float32) - half) / half
    feats = jnp.concatenate([ncoords, pc[:, D + 1:].reshape(-1, 1)], axis=1)
    emb_r, marg_r, seed_r = _reference(feats, ncoords, params)
    tol = 3e-2
    assert float(jnp.max(jnp.abs(emb - emb_r))) < tol
    assert float(jnp.max(jnp.abs(marg - marg_r))) < tol
    assert float(jnp.max(jnp.abs(seed - seed_r))) < tol

    print("KERNEL_OK")
</pallas_src>

<mosaic_0001>
module attributes {stable_mosaic.version = 11 : i64} {
  func.func @spice_kernel(%arg0: i32, %arg1: memref<8x1024xbf16, #tpu.memory_space<vmem>>, %arg2: memref<32x8xf32, #tpu.memory_space<vmem>>, %arg3: memref<8x32xf32, #tpu.memory_space<vmem>>, %arg4: memref<8x1xf32, #tpu.memory_space<vmem>>, %arg5: memref<8x1xf32, #tpu.memory_space<vmem>>, %arg6: memref<8x1xf32, #tpu.memory_space<vmem>>, %arg7: memref<8x1024xbf16, #tpu.memory_space<vmem>>) attributes {dimension_semantics = [#tpu.dimension_semantics<parallel>], iteration_bounds = array<i64: 1>, scalar_prefetch = 0 : i64, scratch_operands = 0 : i64, tpu.core_type = #tpu.core_type<tc>, window_params = [{transform_indices = @transform_0, window_bounds = array<i64: 8, 1024>}, {pipeline_mode = #tpu.pipeline_mode<synchronous>, transform_indices = @transform_1, window_bounds = array<i64: 32, 8>}, {pipeline_mode = #tpu.pipeline_mode<synchronous>, transform_indices = @transform_2, window_bounds = array<i64: 8, 32>}, {pipeline_mode = #tpu.pipeline_mode<synchronous>, transform_indices = @transform_3, window_bounds = array<i64: 8, 1>}, {pipeline_mode = #tpu.pipeline_mode<synchronous>, transform_indices = @transform_4, window_bounds = array<i64: 8, 1>}, {pipeline_mode = #tpu.pipeline_mode<synchronous>, transform_indices = @transform_5, window_bounds = array<i64: 8, 1>}, {transform_indices = @transform_6, window_bounds = array<i64: 8, 1024>}]} {
    %c0 = arith.constant 0 : index
    %c0_0 = arith.constant 0 : index
    %0 = vector.load %arg1[%c0, %c0_0] : memref<8x1024xbf16, #tpu.memory_space<vmem>>, vector<8x1024xbf16>
    %1 = arith.extf %0 : vector<8x1024xbf16> to vector<8x1024xf32>
    %c0_1 = arith.constant 0 : index
    %c0_2 = arith.constant 0 : index
    %2 = vector.load %arg2[%c0_1, %c0_2] : memref<32x8xf32, #tpu.memory_space<vmem>>, vector<32x8xf32>
    %cst = arith.constant dense<0.000000e+00> : vector<32x1024xf32>
    %3 = tpu.matmul %2, %1, %cst {dimension_numbers = #tpu.dot_dimension_numbers<[1], [0], [0], [1], [0, 0, 1, 1], [], []>} : vector<32x8xf32>, vector<8x1024xf32>, vector<32x1024xf32> -> vector<32x1024xf32>
    %cst_3 = arith.constant 0.000000e+00 : f32
    %4 = vector.broadcast %cst_3 : f32 to vector<32x1024xf32>
    %5 = arith.maximumf %3, %4 : vector<32x1024xf32>
    %c0_4 = arith.constant 0 : index
    %c0_5 = arith.constant 0 : index
    %6 = vector.load %arg3[%c0_4, %c0_5] : memref<8x32xf32, #tpu.memory_space<vmem>>, vector<8x32xf32>
    %cst_6 = arith.constant dense<0.000000e+00> : vector<8x1024xf32>
    %7 = tpu.matmul %6, %5, %cst_6 {dimension_numbers = #tpu.dot_dimension_numbers<[1], [0], [0], [1], [0, 0, 1, 1], [], []>} : vector<8x32xf32>, vector<32x1024xf32>, vector<8x1024xf32> -> vector<8x1024xf32>
    %c0_7 = arith.constant 0 : index
    %c0_8 = arith.constant 0 : index
    %8 = vector.load %arg4[%c0_7, %c0_8] : memref<8x1xf32, #tpu.memory_space<vmem>>, vector<8x1xf32>
    %9 = vector.broadcast %8 : vector<8x1xf32> to vector<8x1024xf32>
    %10 = arith.addf %7, %9 : vector<8x1024xf32>
    %cst_9 = arith.constant -3.000000e+01 : f32
    %cst_10 = arith.constant 3.000000e+01 : f32
    %11 = vector.broadcast %cst_9 : f32 to vector<8x1024xf32>
    %12 = arith.maximumf %11, %10 : vector<8x1024xf32>
    %13 = vector.broadcast %cst_10 : f32 to vector<8x1024xf32>
    %14 = arith.minimumf %13, %12 : vector<8x1024xf32>
    %cst_11 = arith.constant 0.000000e+00 : f32
    %15 = vector.broadcast %cst_11 : f32 to vector<8x1024xf32>
    %16 = arith.subf %15, %14 : vector<8x1024xf32>
    %17 = math.exp %16 : vector<8x1024xf32>
    %cst_12 = arith.constant 1.000000e+00 : f32
    %18 = vector.broadcast %cst_12 : f32 to vector<8x1024xf32>
    %19 = arith.addf %18, %17 : vector<8x1024xf32>
    %20 = tpu.reciprocal %19 {approx = true} : vector<8x1024xf32> -> vector<8x1024xf32>
    %21 = arith.mulf %17, %17 : vector<8x1024xf32>
    %cst_13 = arith.constant 1.000000e+00 : f32
    %22 = vector.broadcast %cst_13 : f32 to vector<8x1024xf32>
    %23 = arith.subf %22, %21 : vector<8x1024xf32>
    %cst_14 = arith.constant 1.000000e+00 : f32
    %24 = vector.broadcast %cst_14 : f32 to vector<8x1024xf32>
    %25 = arith.addf %24, %21 : vector<8x1024xf32>
    %26 = tpu.reciprocal %25 {approx = true} : vector<8x1024xf32> -> vector<8x1024xf32>
    %27 = arith.mulf %23, %26 : vector<8x1024xf32>
    %c0_15 = arith.constant 0 : index
    %c0_16 = arith.constant 0 : index
    %28 = vector.load %arg5[%c0_15, %c0_16] : memref<8x1xf32, #tpu.memory_space<vmem>>, vector<8x1xf32>
    %29 = arith.addf %27, %1 : vector<8x1024xf32>
    %30 = vector.broadcast %28 : vector<8x1xf32> to vector<8x1024xf32>
    %31 = arith.mulf %30, %29 : vector<8x1024xf32>
    %c0_17 = arith.constant 0 : index
    %c0_18 = arith.constant 0 : index
    %32 = vector.load %arg6[%c0_17, %c0_18] : memref<8x1xf32, #tpu.memory_space<vmem>>, vector<8x1xf32>
    %33 = vector.broadcast %32 : vector<8x1xf32> to vector<8x1024xf32>
    %34 = arith.mulf %33, %20 : vector<8x1024xf32>
    %35 = arith.addf %31, %34 : vector<8x1024xf32>
    %36 = arith.truncf %35 : vector<8x1024xf32> to vector<8x1024xbf16>
    %c0_19 = arith.constant 0 : index
    %c0_20 = arith.constant 0 : index
    %37 = vector.load %arg7[%c0_19, %c0_20] : memref<8x1024xbf16, #tpu.memory_space<vmem>>, vector<8x1024xbf16>
    tpu.vector_store %arg7[%c0_19, %c0_20], %36 {strides = array<i32>} : memref<8x1024xbf16, #tpu.memory_space<vmem>>, vector<8x1024xbf16>,
    return
  }
  func.func @transform_0(%arg0: i32) -> (i32, i32) {
    %c0_i32 = arith.constant 0 : i32
    %c0_i32_0 = arith.constant 0 : i32
    return %c0_i32, %arg0 : i32, i32
  }
  func.func @transform_1(%arg0: i32) -> (i32, i32) {
    %c0_i32 = arith.constant 0 : i32
    %c0_i32_0 = arith.constant 0 : i32
    %c0_i32_1 = arith.constant 0 : i32
    return %c0_i32, %c0_i32_0 : i32, i32
  }
  func.func @transform_2(%arg0: i32) -> (i32, i32) {
    %c0_i32 = arith.constant 0 : i32
    %c0_i32_0 = arith.constant 0 : i32
    %c0_i32_1 = arith.constant 0 : i32
    return %c0_i32, %c0_i32_0 : i32, i32
  }
  func.func @transform_3(%arg0: i32) -> (i32, i32) {
    %c0_i32 = arith.constant 0 : i32
    %c0_i32_0 = arith.constant 0 : i32
    %c0_i32_1 = arith.constant 0 : i32
    return %c0_i32, %c0_i32_0 : i32, i32
  }
  func.func @transform_4(%arg0: i32) -> (i32, i32) {
    %c0_i32 = arith.constant 0 : i32
    %c0_i32_0 = arith.constant 0 : i32
    %c0_i32_1 = arith.constant 0 : i32
    return %c0_i32, %c0_i32_0 : i32, i32
  }
  func.func @transform_5(%arg0: i32) -> (i32, i32) {
    %c0_i32 = arith.constant 0 : i32
    %c0_i32_0 = arith.constant 0 : i32
    %c0_i32_1 = arith.constant 0 : i32
    return %c0_i32, %c0_i32_0 : i32, i32
  }
  func.func @transform_6(%arg0: i32) -> (i32, i32) {
    %c0_i32 = arith.constant 0 : i32
    %c0_i32_0 = arith.constant 0 : i32
    return %c0_i32, %arg0 : i32, i32
  }
}

</mosaic_0001>

<llo_original>
// kernel: tpu_custom_call.1
$region0: #{tpu_custom_call.1}
  #allocation0 [shape = 'u32[]', space=smem, size = 0x4, offset = 0x4, fixed_abs, tag = 'smem constant byte address 0x4 - core index']
  #allocation1 [shape = 'u32[72,128]{1,0:T(1,128)}', space=vmem, size = 0x9000, scoped, tag = 'internal scratch']
  %s0 = inlined_call_operand.vmem [shape: bf16[8,1024], index: 0, kind: input, shape index: {}]
  %s1 = inlined_call_operand.vmem [shape: f32[32,8], index: 1, kind: input, shape index: {}]
  %s2 = inlined_call_operand.vmem [shape: f32[8,32], index: 2, kind: input, shape index: {}]
  %s3 = inlined_call_operand.vmem [shape: f32[8,1], index: 3, kind: input, shape index: {}]
  %s4 = inlined_call_operand.vmem [shape: f32[8,1], index: 4, kind: input, shape index: {}]
  %s5 = inlined_call_operand.vmem [shape: f32[8,1], index: 5, kind: input, shape index: {}]
  %s6 = inlined_call_operand.hbm [shape: bf16[8,1024], index: 6, kind: output, shape index: {}]
  %s7 = sld [smem:[#allocation0]]
  $region34: #{tpu_custom_call.1} parent=0
    _
  %s9 = ssub.s32 1, %s7
  %s10 = scalar_select 0, %s9, %s7
  $region1: #{tpu_custom_call.1} parent=0
    #allocation2 [shape = 'u8[16384]{0}', space=vmem, size = 0x4000, scoped, tag = 'output window, operand 0, single buffered']
    #allocation3 [shape = 's32[1]{0}', space=sflag, size = 0x4, scoped, tag = 'scoped memory for tpu_custom_call.1']
    %11 = vsyncpa [#allocation3], 0
    // Predicated region
    $region2: #{tpu_custom_call.1} parent=1 // pred_check
      _
    $region3: #{tpu_custom_call.1} parent=1 // pred_check_branch
      %13 = sbr.rel (0) target = $region5
    $region4: #{tpu_custom_call.1} parent=1 // pred_region
      _
    $region5: #{tpu_custom_call.1} parent=1 // pred_fallthru
      _
    // Predicated region
    $region6: #{tpu_custom_call.1} parent=1 // pred_check
      _
    $region7: #{tpu_custom_call.1} parent=1 // pred_check_branch
      %15 = sbr.rel (0) target = $region9
    $region8: #{tpu_custom_call.1} parent=1 // pred_region
      _
    $region9: #{tpu_custom_call.1} parent=1 // pred_fallthru
      _
    // Predicated region
    $region10: #{tpu_custom_call.1} parent=1 // pred_check
      _
    $region11: #{tpu_custom_call.1} parent=1 // pred_check_branch
      %17 = sbr.rel (0) target = $region13
    $region12: #{tpu_custom_call.1} parent=1 // pred_region
      _
    $region13: #{tpu_custom_call.1} parent=1 // pred_fallthru
      _
    // Predicated region
    $region14: #{tpu_custom_call.1} parent=1 // pred_check
      _
    $region15: #{tpu_custom_call.1} parent=1 // pred_check_branch
      %19 = sbr.rel (0) target = $region17
    $region16: #{tpu_custom_call.1} parent=1 // pred_region
      _
    $region17: #{tpu_custom_call.1} parent=1 // pred_fallthru
      _
    // Predicated region
    $region18: #{tpu_custom_call.1} parent=1 // pred_check
      _
    $region19: #{tpu_custom_call.1} parent=1 // pred_check_branch
      %21 = sbr.rel (0) target = $region21
    $region20: #{tpu_custom_call.1} parent=1 // pred_region
      _
    $region21: #{tpu_custom_call.1} parent=1 // pred_fallthru
      _
    // Predicated region
    $region22: #{tpu_custom_call.1} parent=1 // pred_check
      _
    $region23: #{tpu_custom_call.1} parent=1 // pred_check_branch
      %23 = sbr.rel (0) target = $region25
    $region24: #{tpu_custom_call.1} parent=1 // pred_region
      _
    $region25: #{tpu_custom_call.1} parent=1 // pred_fallthru
      _
    %v24 = vld [vmem:[%s0] sm:$0xff]
    %v25 = vld [vmem:[%s0 + $0x8] sm:$0xff]
    %v26 = vld [vmem:[%s0 + $0x10] sm:$0xff]
    %v27 = vld [vmem:[%s0 + $0x18] sm:$0xff]
    %v28 = vunpack.c.l.bf16 %v24
    %v29 = vunpack.c.h.bf16 %v24
    %v30 = vunpack.c.l.bf16 %v25
    %v31 = vunpack.c.h.bf16 %v25
    %v32 = vunpack.c.l.bf16 %v26
    %v33 = vunpack.c.h.bf16 %v26
    %v34 = vunpack.c.l.bf16 %v27
    %v35 = vunpack.c.h.bf16 %v27
    %v36 = vld [vmem:[%s1] sm:$0xff]
    %v37 = vld [vmem:[%s1 + $0x8] sm:$0xff]
    %v38 = vld [vmem:[%s1 + $0x10] sm:$0xff]
    %v39 = vld [vmem:[%s1 + $0x18] sm:$0xff]
    %vm40 = vcmask 64512
    %v42 = vsel %vm40, %v36, 0
    %v45 = vsel %vm40, %v37, 0
    %v48 = vsel %vm40, %v38, 0
    %v51 = vsel %vm40, %v39, 0
    %53 = vmatpush.msra.mxu0 0.0
    %54 = vmatpush.msra.mxu0 0.0
    %55 = vmatpush.msra.mxu0 0.0
    %56 = vmatpush.msra.mxu0 0.0
    %57 = vmatpush.msra.mxu0 0.0
    %58 = vmatpush.msra.mxu0 0.0
    %59 = vmatpush.msra.mxu0 0.0
    %60 = vmatpush.msra.mxu0 0.0
    %61 = vmatpush.msra.mxu0 0.0
    %62 = vmatpush.msra.mxu0 0.0
    %63 = vmatpush.msra.mxu0 0.0
    %64 = vmatpush.msra.mxu0 0.0
    %65 = vmatpush.msra.mxu0 0.0
    %66 = vmatpush.msra.mxu0 0.0
    %67 = vmatpush.msra.mxu0 0.0
    %68 = vmatpush.msra.mxu0 %v28
    %69 = vmatmul.f32.gmra.mxu0 %v42
    %v70 = vpop.f32.mrf.mxu0
    %v71 = vadd.f32 0.0, %v70
    %72 = vmatmul.f32.gmra.mxu0 %v45
    %v73 = vpop.f32.mrf.mxu0
    %v74 = vadd.f32 0.0, %v73
    %75 = vmatmul.f32.gmra.mxu0 %v48
    %v76 = vpop.f32.mrf.mxu0
    %v77 = vadd.f32 0.0, %v76
    %78 = vmatmul.f32.gmra.mxu0 %v51
    %v79 = vpop.f32.mrf.mxu0
    %v80 = vadd.f32 0.0, %v79
    %81 = vdwg.mxu0
    %82 = vmatpush.msra.mxu0 0.0
    %83 = vmatpush.msra.mxu0 0.0
    %84 = vmatpush.msra.mxu0 0.0
    %85 = vmatpush.msra.mxu0 0.0
    %86 = vmatpush.msra.mxu0 0.0
    %87 = vmatpush.msra.mxu0 0.0
    %88 = vmatpush.msra.mxu0 0.0
    %89 = vmatpush.msra.mxu0 0.0
    %90 = vmatpush.msra.mxu0 0.0
    %91 = vmatpush.msra.mxu0 0.0
    %92 = vmatpush.msra.mxu0 0.0
    %93 = vmatpush.msra.mxu0 0.0
    %94 = vmatpush.msra.mxu0 0.0
    %95 = vmatpush.msra.mxu0 0.0
    %96 = vmatpush.msra.mxu0 0.0
    %97 = vmatpush.msra.mxu0 %v29
    %98 = vmatmul.f32.gmra.mxu0 %v42
    %v99 = vpop.f32.mrf.mxu0
    %v100 = vadd.f32 0.0, %v99
    %101 = vmatmul.f32.gmra.mxu0 %v45
    %v102 = vpop.f32.mrf.mxu0
    %v103 = vadd.f32 0.0, %v102
    %104 = vmatmul.f32.gmra.mxu0 %v48
    %v105 = vpop.f32.mrf.mxu0
    %v106 = vadd.f32 0.0, %v105
    %107 = vmatmul.f32.gmra.mxu0 %v51
    %v108 = vpop.f32.mrf.mxu0
    %v109 = vadd.f32 0.0, %v108
    %110 = vdwg.mxu0
    %111 = vmatpush.msra.mxu0 0.0
    %112 = vmatpush.msra.mxu0 0.0
    %113 = vmatpush.msra.mxu0 0.0
    %114 = vmatpush.msra.mxu0 0.0
    %115 = vmatpush.msra.mxu0 0.0
    %116 = vmatpush.msra.mxu0 0.0
    %117 = vmatpush.msra.mxu0 0.0
    %118 = vmatpush.msra.mxu0 0.0
    %119 = vmatpush.msra.mxu0 0.0
    %120 = vmatpush.msra.mxu0 0.0
    %121 = vmatpush.msra.mxu0 0.0
    %122 = vmatpush.msra.mxu0 0.0
    %123 = vmatpush.msra.mxu0 0.0
    %124 = vmatpush.msra.mxu0 0.0
    %125 = vmatpush.msra.mxu0 0.0
    %126 = vmatpush.msra.mxu0 %v30
    %127 = vmatmul.f32.gmra.mxu0 %v42
    %v128 = vpop.f32.mrf.mxu0
    %v129 = vadd.f32 0.0, %v128
    %130 = vmatmul.f32.gmra.mxu0 %v45
    %v131 = vpop.f32.mrf.mxu0
    %v132 = vadd.f32 0.0, %v131
    %133 = vmatmul.f32.gmra.mxu0 %v48
    %v134 = vpop.f32.mrf.mxu0
    %v135 = vadd.f32 0.0, %v134
    %136 = vmatmul.f32.gmra.mxu0 %v51
    %v137 = vpop.f32.mrf.mxu0
    %v138 = vadd.f32 0.0, %v137
    %139 = vdwg.mxu0
    %140 = vmatpush.msra.mxu0 0.0
    %141 = vmatpush.msra.mxu0 0.0
    %142 = vmatpush.msra.mxu0 0.0
    %143 = vmatpush.msra.mxu0 0.0
    %144 = vmatpush.msra.mxu0 0.0
    %145 = vmatpush.msra.mxu0 0.0
    %146 = vmatpush.msra.mxu0 0.0
    %147 = vmatpush.msra.mxu0 0.0
    %148 = vmatpush.msra.mxu0 0.0
    %149 = vmatpush.msra.mxu0 0.0
    %150 = vmatpush.msra.mxu0 0.0
    %151 = vmatpush.msra.mxu0 0.0
    %152 = vmatpush.msra.mxu0 0.0
    %153 = vmatpush.msra.mxu0 0.0
    %154 = vmatpush.msra.mxu0 0.0
    %155 = vmatpush.msra.mxu0 %v31
    %156 = vmatmul.f32.gmra.mxu0 %v42
    %v157 = vpop.f32.mrf.mxu0
    %v158 = vadd.f32 0.0, %v157
    %159 = vmatmul.f32.gmra.mxu0 %v45
    %v160 = vpop.f32.mrf.mxu0
    %v161 = vadd.f32 0.0, %v160
    %162 = vmatmul.f32.gmra.mxu0 %v48
    %v163 = vpop.f32.mrf.mxu0
    %v164 = vadd.f32 0.0, %v163
    %165 = vmatmul.f32.gmra.mxu0 %v51
    %v166 = vpop.f32.mrf.mxu0
    %v167 = vadd.f32 0.0, %v166
    %168 = vdwg.mxu0
    %169 = vmatpush.msra.mxu0 0.0
    %170 = vmatpush.msra.mxu0 0.0
    %171 = vmatpush.msra.mxu0 0.0
    %172 = vmatpush.msra.mxu0 0.0
    %173 = vmatpush.msra.mxu0 0.0
    %174 = vmatpush.msra.mxu0 0.0
    %175 = vmatpush.msra.mxu0 0.0
    %176 = vmatpush.msra.mxu0 0.0
    %177 = vmatpush.msra.mxu0 0.0
    %178 = vmatpush.msra.mxu0 0.0
    %179 = vmatpush.msra.mxu0 0.0
    %180 = vmatpush.msra.mxu0 0.0
    %181 = vmatpush.msra.mxu0 0.0
    %182 = vmatpush.msra.mxu0 0.0
    %183 = vmatpush.msra.mxu0 0.0
    %184 = vmatpush.msra.mxu0 %v32
    %185 = vmatmul.f32.gmra.mxu0 %v42
    %v186 = vpop.f32.mrf.mxu0
    %v187 = vadd.f32 0.0, %v186
    %188 = vmatmul.f32.gmra.mxu0 %v45
    %v189 = vpop.f32.mrf.mxu0
    %v190 = vadd.f32 0.0, %v189
    %191 = vmatmul.f32.gmra.mxu0 %v48
    %v192 = vpop.f32.mrf.mxu0
    %v193 = vadd.f32 0.0, %v192
    %194 = vmatmul.f32.gmra.mxu0 %v51
    %v195 = vpop.f32.mrf.mxu0
    %v196 = vadd.f32 0.0, %v195
    %197 = vdwg.mxu0
    %198 = vmatpush.msra.mxu0 0.0
    %199 = vmatpush.msra.mxu0 0.0
    %200 = vmatpush.msra.mxu0 0.0
    %201 = vmatpush.msra.mxu0 0.0
    %202 = vmatpush.msra.mxu0 0.0
    %203 = vmatpush.msra.mxu0 0.0
    %204 = vmatpush.msra.mxu0 0.0
    %205 = vmatpush.msra.mxu0 0.0
    %206 = vmatpush.msra.mxu0 0.0
    %207 = vmatpush.msra.mxu0 0.0
    %208 = vmatpush.msra.mxu0 0.0
    %209 = vmatpush.msra.mxu0 0.0
    %210 = vmatpush.msra.mxu0 0.0
    %211 = vmatpush.msra.mxu0 0.0
    %212 = vmatpush.msra.mxu0 0.0
    %213 = vmatpush.msra.mxu0 %v33
    %214 = vmatmul.f32.gmra.mxu0 %v42
    %v215 = vpop.f32.mrf.mxu0
    %v216 = vadd.f32 0.0, %v215
    %217 = vmatmul.f32.gmra.mxu0 %v45
    %v218 = vpop.f32.mrf.mxu0
    %v219 = vadd.f32 0.0, %v218
    %220 = vmatmul.f32.gmra.mxu0 %v48
    %v221 = vpop.f32.mrf.mxu0
    %v222 = vadd.f32 0.0, %v221
    %223 = vmatmul.f32.gmra.mxu0 %v51
    %v224 = vpop.f32.mrf.mxu0
    %v225 = vadd.f32 0.0, %v224
    %226 = vdwg.mxu0
    %227 = vmatpush.msra.mxu0 0.0
    %228 = vmatpush.msra.mxu0 0.0
    %229 = vmatpush.msra.mxu0 0.0
    %230 = vmatpush.msra.mxu0 0.0
    %231 = vmatpush.msra.mxu0 0.0
    %232 = vmatpush.msra.mxu0 0.0
    %233 = vmatpush.msra.mxu0 0.0
    %234 = vmatpush.msra.mxu0 0.0
    %235 = vmatpush.msra.mxu0 0.0
    %236 = vmatpush.msra.mxu0 0.0
    %237 = vmatpush.msra.mxu0 0.0
    %238 = vmatpush.msra.mxu0 0.0
    %239 = vmatpush.msra.mxu0 0.0
    %240 = vmatpush.msra.mxu0 0.0
    %241 = vmatpush.msra.mxu0 0.0
    %242 = vmatpush.msra.mxu0 %v34
    %243 = vmatmul.f32.gmra.mxu0 %v42
    %v244 = vpop.f32.mrf.mxu0
    %v245 = vadd.f32 0.0, %v244
    %246 = vmatmul.f32.gmra.mxu0 %v45
    %v247 = vpop.f32.mrf.mxu0
    %v248 = vadd.f32 0.0, %v247
    %249 = vmatmul.f32.gmra.mxu0 %v48
    %v250 = vpop.f32.mrf.mxu0
    %v251 = vadd.f32 0.0, %v250
    %252 = vmatmul.f32.gmra.mxu0 %v51
    %v253 = vpop.f32.mrf.mxu0
    %v254 = vadd.f32 0.0, %v253
    %255 = vdwg.mxu0
    %256 = vmatpush.msra.mxu0 0.0
    %257 = vmatpush.msra.mxu0 0.0
    %258 = vmatpush.msra.mxu0 0.0
    %259 = vmatpush.msra.mxu0 0.0
    %260 = vmatpush.msra.mxu0 0.0
    %261 = vmatpush.msra.mxu0 0.0
    %262 = vmatpush.msra.mxu0 0.0
    %263 = vmatpush.msra.mxu0 0.0
    %264 = vmatpush.msra.mxu0 0.0
    %265 = vmatpush.msra.mxu0 0.0
    %266 = vmatpush.msra.mxu0 0.0
    %267 = vmatpush.msra.mxu0 0.0
    %268 = vmatpush.msra.mxu0 0.0
    %269 = vmatpush.msra.mxu0 0.0
    %270 = vmatpush.msra.mxu0 0.0
    %271 = vmatpush.msra.mxu0 %v35
    %272 = vmatmul.f32.gmra.mxu0 %v42
    %v273 = vpop.f32.mrf.mxu0
    %v274 = vadd.f32 0.0, %v273
    %275 = vmatmul.f32.gmra.mxu0 %v45
    %v276 = vpop.f32.mrf.mxu0
    %v277 = vadd.f32 0.0, %v276
    %278 = vmatmul.f32.gmra.mxu0 %v48
    %v279 = vpop.f32.mrf.mxu0
    %v280 = vadd.f32 0.0, %v279
    %281 = vmatmul.f32.gmra.mxu0 %v51
    %v282 = vpop.f32.mrf.mxu0
    %v283 = vadd.f32 0.0, %v282
    %284 = vdwg.mxu0
    %v285 = vmax.f32 %v71, 0.0
    %v286 = vmax.f32 %v100, 0.0
    %v287 = vmax.f32 %v129, 0.0
    %v288 = vmax.f32 %v158, 0.0
    %v289 = vmax.f32 %v187, 0.0
    %v290 = vmax.f32 %v216, 0.0
    %v291 = vmax.f32 %v245, 0.0
    %v292 = vmax.f32 %v274, 0.0
    %v293 = vmax.f32 %v74, 0.0
    %v294 = vmax.f32 %v103, 0.0
    %v295 = vmax.f32 %v132, 0.0
    %v296 = vmax.f32 %v161, 0.0
    %v297 = vmax.f32 %v190, 0.0
    %v298 = vmax.f32 %v219, 0.0
    %v299 = vmax.f32 %v248, 0.0
    %v300 = vmax.f32 %v277, 0.0
    %v301 = vmax.f32 %v77, 0.0
    %v302 = vmax.f32 %v106, 0.0
    %v303 = vmax.f32 %v135, 0.0
    %v304 = vmax.f32 %v164, 0.0
    %v305 = vmax.f32 %v193, 0.0
    %v306 = vmax.f32 %v222, 0.0
    %v307 = vmax.f32 %v251, 0.0
    %v308 = vmax.f32 %v280, 0.0
    %v309 = vmax.f32 %v80, 0.0
    %v310 = vmax.f32 %v109, 0.0
    %v311 = vmax.f32 %v138, 0.0
    %v312 = vmax.f32 %v167, 0.0
    %v313 = vmax.f32 %v196, 0.0
    %v314 = vmax.f32 %v225, 0.0
    %v315 = vmax.f32 %v254, 0.0
    %v316 = vmax.f32 %v283, 0.0
    %v317 = vld [vmem:[%s2] sm:$0xff]
    %v318 = vld [vmem:[%s3] sm:$0xff]
    %320 = vset.pattern.permute.xlu0 0
    %321 = vperm.xlu0 %320, %v318
    %v322 = vpop.permute.xlu0 %321
    %vm324 = vcmask 261120
    %v326 = vsel %vm324, %v317, 0
    %328 = vmatpush.msra.mxu0 0.0
    %329 = vmatpush.msra.mxu0 0.0
    %330 = vmatpush.msra.mxu0 0.0
    %331 = vmatpush.msra.mxu0 0.0
    %332 = vmatpush.msra.mxu0 0.0
    %333 = vmatpush.msra.mxu0 0.0
    %334 = vmatpush.msra.mxu0 0.0
    %335 = vmatpush.msra.mxu0 0.0
    %336 = vmatpush.msra.mxu0 0.0
    %337 = vmatpush.msra.mxu0 0.0
    %338 = vmatpush.msra.mxu0 0.0
    %339 = vmatpush.msra.mxu0 0.0
    %340 = vmatpush.msra.mxu0 %v309
    %341 = vmatpush.msra.mxu0 %v301
    %342 = vmatpush.msra.mxu0 %v293
    %343 = vmatpush.msra.mxu0 %v285
    %344 = vmatmul.f32.gmra.mxu0 %v326
    %v345 = vpop.f32.mrf.mxu0
    %v346 = vadd.f32 %v322, %v345
    %347 = vdwg.mxu0
    %348 = vmatpush.msra.mxu0 0.0
    %349 = vmatpush.msra.mxu0 0.0
    %350 = vmatpush.msra.mxu0 0.0
    %351 = vmatpush.msra.mxu0 0.0
    %352 = vmatpush.msra.mxu0 0.0
    %353 = vmatpush.msra.mxu0 0.0
    %354 = vmatpush.msra.mxu0 0.0
    %355 = vmatpush.msra.mxu0 0.0
    %356 = vmatpush.msra.mxu0 0.0
    %357 = vmatpush.msra.mxu0 0.0
    %358 = vmatpush.msra.mxu0 0.0
    %359 = vmatpush.msra.mxu0 0.0
    %360 = vmatpush.msra.mxu0 %v310
    %361 = vmatpush.msra.mxu0 %v302
    %362 = vmatpush.msra.mxu0 %v294
    %363 = vmatpush.msra.mxu0 %v286
    %364 = vmatmul.f32.gmra.mxu0 %v326
    %v365 = vpop.f32.mrf.mxu0
    %v366 = vadd.f32 %v322, %v365
    %367 = vdwg.mxu0
    %368 = vmatpush.msra.mxu0 0.0
    %369 = vmatpush.msra.mxu0 0.0
    %370 = vmatpush.msra.mxu0 0.0
    %371 = vmatpush.msra.mxu0 0.0
    %372 = vmatpush.msra.mxu0 0.0
    %373 = vmatpush.msra.mxu0 0.0
    %374 = vmatpush.msra.mxu0 0.0
    %375 = vmatpush.msra.mxu0 0.0
    %376 = vmatpush.msra.mxu0 0.0
    %377 = vmatpush.msra.mxu0 0.0
    %378 = vmatpush.msra.mxu0 0.0
    %379 = vmatpush.msra.mxu0 0.0
    %380 = vmatpush.msra.mxu0 %v311
    %381 = vmatpush.msra.mxu0 %v303
    %382 = vmatpush.msra.mxu0 %v295
    %383 = vmatpush.msra.mxu0 %v287
    %384 = vmatmul.f32.gmra.mxu0 %v326
    %v385 = vpop.f32.mrf.mxu0
    %v386 = vadd.f32 %v322, %v385
    %387 = vdwg.mxu0
    %388 = vmatpush.msra.mxu0 0.0
    %389 = vmatpush.msra.mxu0 0.0
    %390 = vmatpush.msra.mxu0 0.0
    %391 = vmatpush.msra.mxu0 0.0
    %392 = vmatpush.msra.mxu0 0.0
    %393 = vmatpush.msra.mxu0 0.0
    %394 = vmatpush.msra.mxu0 0.0
    %395 = vmatpush.msra.mxu0 0.0
    %396 = vmatpush.msra.mxu0 0.0
    %397 = vmatpush.msra.mxu0 0.0
    %398 = vmatpush.msra.mxu0 0.0
    %399 = vmatpush.msra.mxu0 0.0
    %400 = vmatpush.msra.mxu0 %v312
    %401 = vmatpush.msra.mxu0 %v304
    %402 = vmatpush.msra.mxu0 %v296
    %403 = vmatpush.msra.mxu0 %v288
    %404 = vmatmul.f32.gmra.mxu0 %v326
    %v405 = vpop.f32.mrf.mxu0
    %v406 = vadd.f32 %v322, %v405
    %407 = vdwg.mxu0
    %408 = vmatpush.msra.mxu0 0.0
    %409 = vmatpush.msra.mxu0 0.0
    %410 = vmatpush.msra.mxu0 0.0
    %411 = vmatpush.msra.mxu0 0.0
    %412 = vmatpush.msra.mxu0 0.0
    %413 = vmatpush.msra.mxu0 0.0
    %414 = vmatpush.msra.mxu0 0.0
    %415 = vmatpush.msra.mxu0 0.0
    %416 = vmatpush.msra.mxu0 0.0
    %417 = vmatpush.msra.mxu0 0.0
    %418 = vmatpush.msra.mxu0 0.0
    %419 = vmatpush.msra.mxu0 0.0
    %420 = vmatpush.msra.mxu0 %v313
    %421 = vmatpush.msra.mxu0 %v305
    %422 = vmatpush.msra.mxu0 %v297
    %423 = vmatpush.msra.mxu0 %v289
    %424 = vmatmul.f32.gmra.mxu0 %v326
    %v425 = vpop.f32.mrf.mxu0
    %v426 = vadd.f32 %v322, %v425
    %427 = vdwg.mxu0
    %428 = vmatpush.msra.mxu0 0.0
    %429 = vmatpush.msra.mxu0 0.0
    %430 = vmatpush.msra.mxu0 0.0
    %431 = vmatpush.msra.mxu0 0.0
    %432 = vmatpush.msra.mxu0 0.0
    %433 = vmatpush.msra.mxu0 0.0
    %434 = vmatpush.msra.mxu0 0.0
    %435 = vmatpush.msra.mxu0 0.0
    %436 = vmatpush.msra.mxu0 0.0
    %437 = vmatpush.msra.mxu0 0.0
    %438 = vmatpush.msra.mxu0 0.0
    %439 = vmatpush.msra.mxu0 0.0
    %440 = vmatpush.msra.mxu0 %v314
    %441 = vmatpush.msra.mxu0 %v306
    %442 = vmatpush.msra.mxu0 %v298
    %443 = vmatpush.msra.mxu0 %v290
    %444 = vmatmul.f32.gmra.mxu0 %v326
    %v445 = vpop.f32.mrf.mxu0
    %v446 = vadd.f32 %v322, %v445
    %447 = vdwg.mxu0
    %448 = vmatpush.msra.mxu0 0.0
    %449 = vmatpush.msra.mxu0 0.0
    %450 = vmatpush.msra.mxu0 0.0
    %451 = vmatpush.msra.mxu0 0.0
    %452 = vmatpush.msra.mxu0 0.0
    %453 = vmatpush.msra.mxu0 0.0
    %454 = vmatpush.msra.mxu0 0.0
    %455 = vmatpush.msra.mxu0 0.0
    %456 = vmatpush.msra.mxu0 0.0
    %457 = vmatpush.msra.mxu0 0.0
    %458 = vmatpush.msra.mxu0 0.0
    %459 = vmatpush.msra.mxu0 0.0
    %460 = vmatpush.msra.mxu0 %v315
    %461 = vmatpush.msra.mxu0 %v307
    %462 = vmatpush.msra.mxu0 %v299
    %463 = vmatpush.msra.mxu0 %v291
    %464 = vmatmul.f32.gmra.mxu0 %v326
    %v465 = vpop.f32.mrf.mxu0
    %v466 = vadd.f32 %v322, %v465
    %467 = vdwg.mxu0
    %468 = vmatpush.msra.mxu0 0.0
    %469 = vmatpush.msra.mxu0 0.0
    %470 = vmatpush.msra.mxu0 0.0
    %471 = vmatpush.msra.mxu0 0.0
    %472 = vmatpush.msra.mxu0 0.0
    %473 = vmatpush.msra.mxu0 0.0
    %474 = vmatpush.msra.mxu0 0.0
    %475 = vmatpush.msra.mxu0 0.0
    %476 = vmatpush.msra.mxu0 0.0
    %477 = vmatpush.msra.mxu0 0.0
    %478 = vmatpush.msra.mxu0 0.0
    %479 = vmatpush.msra.mxu0 0.0
    %480 = vmatpush.msra.mxu0 %v316
    %481 = vmatpush.msra.mxu0 %v308
    %482 = vmatpush.msra.mxu0 %v300
    %483 = vmatpush.msra.mxu0 %v292
    %484 = vmatmul.f32.gmra.mxu0 %v326
    %v485 = vpop.f32.mrf.mxu0
    %v486 = vadd.f32 %v322, %v485
    %487 = vdwg.mxu0
    %v488 = vmax.f32 %v346, -30.0
    %v489 = vmax.f32 %v366, -30.0
    %v490 = vmax.f32 %v386, -30.0
    %v491 = vmax.f32 %v406, -30.0
    %v492 = vmax.f32 %v426, -30.0
    %v493 = vmax.f32 %v446, -30.0
    %v494 = vmax.f32 %v466, -30.0
    %v495 = vmax.f32 %v486, -30.0
    %v496 = vmin.f32 %v488, 30.0
    %v497 = vmin.f32 %v489, 30.0
    %v498 = vmin.f32 %v490, 30.0
    %v499 = vmin.f32 %v491, 30.0
    %v500 = vmin.f32 %v492, 30.0
    %v501 = vmin.f32 %v493, 30.0
    %v502 = vmin.f32 %v494, 30.0
    %v503 = vmin.f32 %v495, 30.0
    %v504 = vsub.f32 0.0, %v496
    %v505 = vsub.f32 0.0, %v497
    %v506 = vsub.f32 0.0, %v498
    %v507 = vsub.f32 0.0, %v499
    %v508 = vsub.f32 0.0, %v500
    %v509 = vsub.f32 0.0, %v501
    %v510 = vsub.f32 0.0, %v502
    %v511 = vsub.f32 0.0, %v503
    %v512 = vmul.f32 %v504, 1.442695
    %v513 = vpow.pop %v512
    %v514 = vmul.f32 %v505, 1.442695
    %v515 = vpow.pop %v514
    %v516 = vmul.f32 %v506, 1.442695
    %v517 = vpow.pop %v516
    %v518 = vmul.f32 %v507, 1.442695
    %v519 = vpow.pop %v518
    %v520 = vmul.f32 %v508, 1.442695
    %v521 = vpow.pop %v520
    %v522 = vmul.f32 %v509, 1.442695
    %v523 = vpow.pop %v522
    %v524 = vmul.f32 %v510, 1.442695
    %v525 = vpow.pop %v524
    %v526 = vmul.f32 %v511, 1.442695
    %v527 = vpow.pop %v526
    %v528 = vadd.f32 %v513, 1.0
    %v529 = vadd.f32 %v515, 1.0
    %v530 = vadd.f32 %v517, 1.0
    %v531 = vadd.f32 %v519, 1.0
    %v532 = vadd.f32 %v521, 1.0
    %v533 = vadd.f32 %v523, 1.0
    %v534 = vadd.f32 %v525, 1.0
    %v535 = vadd.f32 %v527, 1.0
    %v536 = vrcp.pop %v528
    %v537 = vrcp.pop %v529
    %v538 = vrcp.pop %v530
    %v539 = vrcp.pop %v531
    %v540 = vrcp.pop %v532
    %v541 = vrcp.pop %v533
    %v542 = vrcp.pop %v534
    %v543 = vrcp.pop %v535
    %v544 = vmul.f32 %v513, %v513
    %v545 = vmul.f32 %v515, %v515
    %v546 = vmul.f32 %v517, %v517
    %v547 = vmul.f32 %v519, %v519
    %v548 = vmul.f32 %v521, %v521
    %v549 = vmul.f32 %v523, %v523
    %v550 = vmul.f32 %v525, %v525
    %v551 = vmul.f32 %v527, %v527
    %v552 = vsub.f32 1.0, %v544
    %v553 = vsub.f32 1.0, %v545
    %v554 = vsub.f32 1.0, %v546
    %v555 = vsub.f32 1.0, %v547
    %v556 = vsub.f32 1.0, %v548
    %v557 = vsub.f32 1.0, %v549
    %v558 = vsub.f32 1.0, %v550
    %v559 = vsub.f32 1.0, %v551
    %v560 = vadd.f32 %v544, 1.0
    %v561 = vadd.f32 %v545, 1.0
    %v562 = vadd.f32 %v546, 1.0
    %v563 = vadd.f32 %v547, 1.0
    %v564 = vadd.f32 %v548, 1.0
    %v565 = vadd.f32 %v549, 1.0
    %v566 = vadd.f32 %v550, 1.0
    %v567 = vadd.f32 %v551, 1.0
    %v568 = vrcp.pop %v560
    %v569 = vrcp.pop %v561
    %v570 = vrcp.pop %v562
    %v571 = vrcp.pop %v563
    %v572 = vrcp.pop %v564
    %v573 = vrcp.pop %v565
    %v574 = vrcp.pop %v566
    %v575 = vrcp.pop %v567
    %v576 = vmul.f32 %v552, %v568
    %v577 = vmul.f32 %v553, %v569
    %v578 = vmul.f32 %v554, %v570
    %v579 = vmul.f32 %v555, %v571
    %v580 = vmul.f32 %v556, %v572
    %v581 = vmul.f32 %v557, %v573
    %v582 = vmul.f32 %v558, %v574
    %v583 = vmul.f32 %v559, %v575
    %v584 = vld [vmem:[%s4] sm:$0xff]
    %v585 = vadd.f32 %v576, %v28
    %v586 = vadd.f32 %v577, %v29
    %v587 = vadd.f32 %v578, %v30
    %v588 = vadd.f32 %v579, %v31
    %v589 = vadd.f32 %v580, %v32
    %v590 = vadd.f32 %v581, %v33
    %v591 = vadd.f32 %v582, %v34
    %v592 = vadd.f32 %v583, %v35
    %594 = vset.pattern.permute.xlu0 0
    %595 = vperm.xlu0 %594, %v584
    %v596 = vpop.permute.xlu0 %595
    %v598 = vmul.f32 %v596, %v585
    %v599 = vmul.f32 %v596, %v586
    %v600 = vmul.f32 %v596, %v587
    %v601 = vmul.f32 %v596, %v588
    %v602 = vmul.f32 %v596, %v589
    %v603 = vmul.f32 %v596, %v590
    %v604 = vmul.f32 %v596, %v591
    %v605 = vmul.f32 %v596, %v592
    %v606 = vld [vmem:[%s5] sm:$0xff]
    %608 = vset.pattern.permute.xlu0 0
    %609 = vperm.xlu0 %608, %v606
    %v610 = vpop.permute.xlu0 %609
    %v612 = vmul.f32 %v610, %v536
    %v613 = vmul.f32 %v610, %v537
    %v614 = vmul.f32 %v610, %v538
    %v615 = vmul.f32 %v610, %v539
    %v616 = vmul.f32 %v610, %v540
    %v617 = vmul.f32 %v610, %v541
    %v618 = vmul.f32 %v610, %v542
    %v619 = vmul.f32 %v610, %v543
    %v620 = vadd.f32 %v598, %v612
    %v621 = vadd.f32 %v599, %v613
    %v622 = vadd.f32 %v600, %v614
    %v623 = vadd.f32 %v601, %v615
    %v624 = vadd.f32 %v602, %v616
    %v625 = vadd.f32 %v603, %v617
    %v626 = vadd.f32 %v604, %v618
    %v627 = vadd.f32 %v605, %v619
    %v628 = vpack.c.bf16 %v621, %v620
    %v629 = vpack.c.bf16 %v623, %v622
    %v630 = vpack.c.bf16 %v625, %v624
    %v631 = vpack.c.bf16 %v627, %v626
    %632 = vst [vmem:[#allocation2] sm:$0xff] %v628
    %633 = vst [vmem:[#allocation2 + $0x8] sm:$0xff] %v629
    %634 = vst [vmem:[#allocation2 + $0x10] sm:$0xff] %v630
    %635 = vst [vmem:[#allocation2 + $0x18] sm:$0xff] %v631
    // Predicated region
    $region26: #{tpu_custom_call.1} parent=1 // pred_check
      _
    $region27: #{tpu_custom_call.1} parent=1 // pred_check_branch
      %637 = sbr.rel (0) target = $region29
    $region28: #{tpu_custom_call.1} parent=1 // pred_region
      %639 = vsyncadd [#allocation3], 0
      %s641 = sshll.u32 [#allocation2], 4
      %s642 = int_to_ptr.vmem [resolvable:$true] %s641
      %s643 = sshll.u32 %s6, 4
      %s644 = int_to_ptr.hbm [resolvable:$true] %s643
      %646 = dma.vmem_to_hbm [thread:$0]  %s642, 512, %s644, [#allocation3]
    $region29: #{tpu_custom_call.1} parent=1 // pred_fallthru
      _
    // Predicated region
    $region30: #{tpu_custom_call.1} parent=1 // pred_check
      _
    $region31: #{tpu_custom_call.1} parent=1 // pred_check_branch
      %648 = sbr.rel (0) target = $region33
    $region32: #{tpu_custom_call.1} parent=1 // pred_region
      %650 = dma.done [#allocation3], 512
    $region33: #{tpu_custom_call.1} parent=1 // pred_fallthru
      _
    %651 = vsyncpa [#allocation3], 1

</llo_original>
